<compile_context>
chip_gen: v7x
topology: tpu7x:2x2x1
jax: 0.10.0
libtpu: 0.0.40
codegen_flags: <defaults>
</compile_context>

<pallas_src>
import functools

import jax
import jax.numpy as jnp
from jax import lax
from jax.experimental import pallas as pl
from jax.experimental.pallas import tpu as pltpu


def _round_up(x, m):
    return (x + m - 1) // m * m


def forward_kernel(ids_ref, emb_ref, w_ref, b_ref, probs_ref):
    # ids_ref  : (TB, S)   int32  token ids for this batch tile
    # emb_ref  : (Vp, Ep)  bf16   embedding table (zero-padded)
    # w_ref    : (Ep, Cp)  bf16   classifier weight (zero-padded)
    # b_ref    : (1, Cp)   f32    classifier bias   (zero-padded)
    # probs_ref: (TB, Cp)  f32    sigmoid probabilities (lane-dense store)
    TB, S = ids_ref.shape
    Vp = emb_ref.shape[0]

    ids = ids_ref[...]                                            # (TB, S)

    # Fused gather + mean-pool:  mean_s(onehot @ E) == (sum_s onehot) @ E * (1/S).
    # counts[b, v] = #{s : ids[b, s] == v}  (exact small integers -> exact in bf16).
    iota_v = lax.broadcasted_iota(jnp.int32, (TB, S, Vp), 2)
    onehot = (ids.reshape(TB, S, 1) == iota_v).astype(jnp.float32)
    counts = jnp.sum(onehot, axis=1)                              # (TB, Vp) f32

    # (TB, Vp) @ (Vp, Ep) on the MXU, bf16 operands, f32 accumulation.
    pooled = jnp.dot(counts.astype(jnp.bfloat16), emb_ref[...],
                     preferred_element_type=jnp.float32) * jnp.float32(1.0 / S)

    # Dense head: (TB, Ep) @ (Ep, Cp) + bias, then sigmoid (all epilogue in f32).
    logits = jnp.dot(pooled.astype(jnp.bfloat16), w_ref[...],
                     preferred_element_type=jnp.float32) + b_ref[...]
    probs_ref[...] = jax.nn.sigmoid(logits)


@functools.partial(jax.jit, static_argnames=("tb",))
def forward(ids, emb_table, w, b, *, tb=8):
    B, S = ids.shape
    V, E = emb_table.shape
    C = w.shape[1]

    Bp = _round_up(B, tb)
    Vp = _round_up(V, 128)
    Ep = _round_up(E, 128)
    Cp = _round_up(C, 128)

    # Pad to lane-dense shapes; padded vocab/feature/class slots are zero and the
    # padded outputs are sliced away below. Weights stream as bf16 (half HBM traffic,
    # full-rate MXU on v6e/v7x); bias stays f32 for the f32 epilogue.
    ids_p = jnp.pad(ids.astype(jnp.int32), ((0, Bp - B), (0, 0)))
    emb_p = jnp.pad(emb_table, ((0, Vp - V), (0, Ep - E))).astype(jnp.bfloat16)
    w_p = jnp.pad(w, ((0, Ep - E), (0, Cp - C))).astype(jnp.bfloat16)
    b_p = jnp.pad(b, ((0, 0), (0, Cp - C))).astype(jnp.float32)

    grid = (Bp // tb,)

    flops = 2 * Bp * Vp * Ep + 2 * Bp * Ep * Cp
    bytes_accessed = (ids_p.size * 4 + emb_p.size * 2 + w_p.size * 2
                      + b_p.size * 4 + Bp * Cp * 4)

    probs_p = pl.pallas_call(
        forward_kernel,
        out_shape=jax.ShapeDtypeStruct((Bp, Cp), jnp.float32),
        grid_spec=pltpu.PrefetchScalarGridSpec(
            num_scalar_prefetch=0,
            grid=grid,
            in_specs=[
                pl.BlockSpec((tb, S), lambda i: (i, 0)),      # batch tile of ids
                pl.BlockSpec((Vp, Ep), lambda i: (0, 0)),     # table resident
                pl.BlockSpec((Ep, Cp), lambda i: (0, 0)),     # weight resident
                pl.BlockSpec((1, Cp), lambda i: (0, 0)),      # bias resident
            ],
            out_specs=pl.BlockSpec((tb, Cp), lambda i: (i, 0)),
        ),
        compiler_params=pltpu.CompilerParams(
            dimension_semantics=("parallel",),                # megacore batch split
            vmem_limit_bytes=32 * 1024 * 1024,
        ),
        cost_estimate=pl.CostEstimate(
            flops=flops, transcendentals=Bp * Cp, bytes_accessed=bytes_accessed),
    )(ids_p, emb_p, w_p, b_p)

    return probs_p[:B, :C]


def predict(ids, emb_table, w, b):
    """Mirrors NeuralNetwork.predict(): returns (probs, probs > 0.5, argmax over classes)."""
    probs = forward(ids, emb_table, w, b)
    y_pred = probs > 0.5
    y_pred_top = jnp.argmax(probs, axis=1)
    return probs, y_pred, y_pred_top


def _reference_forward(ids, emb_table, w, b):
    """Pure-JAX f32 reference for correctness checking."""
    pooled = jnp.mean(emb_table[ids], axis=1)                 # (B, E)
    return jax.nn.sigmoid(pooled @ w + b)                     # (B, C)


if __name__ == "__main__":
    # Small, deterministic synthetic shapes consistent with the module's contract.
    B, S = 8, 16          # batch, sequence length (token ids)
    V, E = 64, 32         # vocab size, embedding dim
    C = 8                 # number of labels (multi-label, BCE)

    key = jax.random.PRNGKey(0)
    k_ids, k_emb, k_w, k_b = jax.random.split(key, 4)

    ids = jax.random.randint(k_ids, (B, S), 0, V, dtype=jnp.int32)
    emb_table = jax.random.normal(k_emb, (V, E), dtype=jnp.float32) * 0.1
    w = jax.random.normal(k_w, (E, C), dtype=jnp.float32) * 0.1
    b = jax.random.normal(k_b, (1, C), dtype=jnp.float32) * 0.1

    probs, y_pred, y_pred_top = predict(ids, emb_table, w, b)
    jax.block_until_ready((probs, y_pred, y_pred_top))

    assert probs.shape == (B, C)
    assert y_pred.shape == (B, C)
    assert y_pred_top.shape == (B,)
    assert bool(jnp.all((probs >= 0.0) & (probs <= 1.0)))

    # Numerical check against the f32 reference (bf16 MXU operands -> loose atol).
    ref = _reference_forward(ids, emb_table, w, b)
    assert bool(jnp.all(jnp.abs(probs - ref) < 2e-2)), "kernel mismatch vs reference"

    print("KERNEL_OK")
</pallas_src>

<mosaic_0001>
module attributes {stable_mosaic.version = 11 : i64} {
  func.func @forward_kernel(%arg0: i32, %arg1: memref<8x16xi32, #tpu.memory_space<vmem>>, %arg2: memref<128x128xbf16, #tpu.memory_space<vmem>>, %arg3: memref<128x128xbf16, #tpu.memory_space<vmem>>, %arg4: memref<1x128xf32, #tpu.memory_space<vmem>>, %arg5: memref<8x128xf32, #tpu.memory_space<vmem>>) attributes {dimension_semantics = [#tpu.dimension_semantics<parallel>], iteration_bounds = array<i64: 1>, scalar_prefetch = 0 : i64, scratch_operands = 0 : i64, tpu.core_type = #tpu.core_type<tc>, window_params = [{transform_indices = @transform_0, window_bounds = array<i64: 8, 16>}, {pipeline_mode = #tpu.pipeline_mode<synchronous>, transform_indices = @transform_1, window_bounds = array<i64: 128, 128>}, {pipeline_mode = #tpu.pipeline_mode<synchronous>, transform_indices = @transform_2, window_bounds = array<i64: 128, 128>}, {pipeline_mode = #tpu.pipeline_mode<synchronous>, transform_indices = @transform_3, window_bounds = array<i64: 1, 128>}, {transform_indices = @transform_4, window_bounds = array<i64: 8, 128>}]} {
    %c0 = arith.constant 0 : index
    %c0_0 = arith.constant 0 : index
    %0 = vector.load %arg1[%c0, %c0_0] : memref<8x16xi32, #tpu.memory_space<vmem>>, vector<8x16xi32>
    %1 = tpu.iota {dimensions = array<i32: 2>} : vector<8x16x128xi32>
    %2 = vector.shape_cast %0 : vector<8x16xi32> to vector<8x16x1xi32>
    %3 = vector.broadcast %2 : vector<8x16x1xi32> to vector<8x16x128xi32>
    %4 = arith.cmpi eq, %3, %1 : vector<8x16x128xi32>
    %5 = arith.extui %4 : vector<8x16x128xi1> to vector<8x16x128xi32>
    %6 = arith.sitofp %5 : vector<8x16x128xi32> to vector<8x16x128xf32>
    %cst = arith.constant dense<0.000000e+00> : vector<8x128xf32>
    %7 = vector.multi_reduction <add>, %6, %cst [1] : vector<8x16x128xf32> to vector<8x128xf32>
    %8 = arith.truncf %7 : vector<8x128xf32> to vector<8x128xbf16>
    %c0_1 = arith.constant 0 : index
    %c0_2 = arith.constant 0 : index
    %9 = vector.load %arg2[%c0_1, %c0_2] : memref<128x128xbf16, #tpu.memory_space<vmem>>, vector<128x128xbf16>
    %cst_3 = arith.constant dense<0.000000e+00> : vector<8x128xf32>
    %10 = tpu.matmul %8, %9, %cst_3 {dimension_numbers = #tpu.dot_dimension_numbers<[1], [0], [0], [1], [0, 0, 1, 1], [], []>} : vector<8x128xbf16>, vector<128x128xbf16>, vector<8x128xf32> -> vector<8x128xf32>
    %cst_4 = arith.constant 6.250000e-02 : f32
    %11 = vector.broadcast %cst_4 : f32 to vector<8x128xf32>
    %12 = arith.mulf %10, %11 : vector<8x128xf32>
    %13 = arith.truncf %12 : vector<8x128xf32> to vector<8x128xbf16>
    %c0_5 = arith.constant 0 : index
    %c0_6 = arith.constant 0 : index
    %14 = vector.load %arg3[%c0_5, %c0_6] : memref<128x128xbf16, #tpu.memory_space<vmem>>, vector<128x128xbf16>
    %cst_7 = arith.constant dense<0.000000e+00> : vector<8x128xf32>
    %15 = tpu.matmul %13, %14, %cst_7 {dimension_numbers = #tpu.dot_dimension_numbers<[1], [0], [0], [1], [0, 0, 1, 1], [], []>} : vector<8x128xbf16>, vector<128x128xbf16>, vector<8x128xf32> -> vector<8x128xf32>
    %c0_8 = arith.constant 0 : index
    %c0_9 = arith.constant 0 : index
    %16 = vector.load %arg4[%c0_8, %c0_9] : memref<1x128xf32, #tpu.memory_space<vmem>>, vector<1x128xf32>
    %17 = vector.broadcast %16 : vector<1x128xf32> to vector<8x128xf32>
    %18 = arith.addf %15, %17 : vector<8x128xf32>
    %19 = arith.negf %18 : vector<8x128xf32>
    %20 = math.exp %19 : vector<8x128xf32>
    %cst_10 = arith.constant 1.000000e+00 : f32
    %21 = vector.broadcast %cst_10 : f32 to vector<8x128xf32>
    %22 = arith.addf %21, %20 : vector<8x128xf32>
    %23 = arith.divf %21, %22 : vector<8x128xf32>
    %c0_11 = arith.constant 0 : index
    %c0_12 = arith.constant 0 : index
    %24 = vector.load %arg5[%c0_11, %c0_12] : memref<8x128xf32, #tpu.memory_space<vmem>>, vector<8x128xf32>
    tpu.vector_store %arg5[%c0_11, %c0_12], %23 {strides = array<i32>} : memref<8x128xf32, #tpu.memory_space<vmem>>, vector<8x128xf32>,
    return
  }
  func.func @transform_0(%arg0: i32) -> (i32, i32) {
    %c0_i32 = arith.constant 0 : i32
    %c0_i32_0 = arith.constant 0 : i32
    return %arg0, %c0_i32 : i32, i32
  }
  func.func @transform_1(%arg0: i32) -> (i32, i32) {
    %c0_i32 = arith.constant 0 : i32
    %c0_i32_0 = arith.constant 0 : i32
    %c0_i32_1 = arith.constant 0 : i32
    return %c0_i32, %c0_i32_0 : i32, i32
  }
  func.func @transform_2(%arg0: i32) -> (i32, i32) {
    %c0_i32 = arith.constant 0 : i32
    %c0_i32_0 = arith.constant 0 : i32
    %c0_i32_1 = arith.constant 0 : i32
    return %c0_i32, %c0_i32_0 : i32, i32
  }
  func.func @transform_3(%arg0: i32) -> (i32, i32) {
    %c0_i32 = arith.constant 0 : i32
    %c0_i32_0 = arith.constant 0 : i32
    %c0_i32_1 = arith.constant 0 : i32
    return %c0_i32, %c0_i32_0 : i32, i32
  }
  func.func @transform_4(%arg0: i32) -> (i32, i32) {
    %c0_i32 = arith.constant 0 : i32
    %c0_i32_0 = arith.constant 0 : i32
    return %arg0, %c0_i32 : i32, i32
  }
}

</mosaic_0001>

<llo_original>
// kernel: forward.1
$region0: #{forward.1}
  #allocation0 [shape = 'u32[]', space=smem, size = 0x4, offset = 0x4, fixed_abs, tag = 'smem constant byte address 0x4 - core index']
  #allocation1 [shape = 'u32[144,128]{1,0:T(1,128)}', space=vmem, size = 0x12000, scoped, tag = 'internal scratch']
  %s0 = inlined_call_operand.vmem [shape: s32[8,16], index: 0, kind: input, shape index: {}]
  %s1 = inlined_call_operand.vmem [shape: bf16[128,128], index: 1, kind: input, shape index: {}]
  %s2 = inlined_call_operand.vmem [shape: bf16[128,128], index: 2, kind: input, shape index: {}]
  %s3 = inlined_call_operand.vmem [shape: f32[1,128], index: 3, kind: input, shape index: {}]
  %s4 = inlined_call_operand.hbm [shape: f32[8,128], index: 4, kind: output, shape index: {}]
  %s5 = sld [smem:[#allocation0]]
  $region26: #{forward.1} parent=0
    _
  %s7 = ssub.s32 1, %s5
  %s8 = scalar_select 0, %s7, %s5
  $region1: #{forward.1} parent=0
    #allocation2 [shape = 'u8[4096]{0}', space=vmem, size = 0x1000, scoped, tag = 'output window, operand 0, single buffered']
    #allocation3 [shape = 's32[1]{0}', space=sflag, size = 0x4, scoped, tag = 'scoped memory for forward.1']
    %9 = vsyncpa [#allocation3], 0
    // Predicated region
    $region2: #{forward.1} parent=1 // pred_check
      _
    $region3: #{forward.1} parent=1 // pred_check_branch
      %11 = sbr.rel (0) target = $region5
    $region4: #{forward.1} parent=1 // pred_region
      _
    $region5: #{forward.1} parent=1 // pred_fallthru
      _
    // Predicated region
    $region6: #{forward.1} parent=1 // pred_check
      _
    $region7: #{forward.1} parent=1 // pred_check_branch
      %13 = sbr.rel (0) target = $region9
    $region8: #{forward.1} parent=1 // pred_region
      _
    $region9: #{forward.1} parent=1 // pred_fallthru
      _
    // Predicated region
    $region10: #{forward.1} parent=1 // pred_check
      _
    $region11: #{forward.1} parent=1 // pred_check_branch
      %15 = sbr.rel (0) target = $region13
    $region12: #{forward.1} parent=1 // pred_region
      _
    $region13: #{forward.1} parent=1 // pred_fallthru
      _
    // Predicated region
    $region14: #{forward.1} parent=1 // pred_check
      _
    $region15: #{forward.1} parent=1 // pred_check_branch
      %17 = sbr.rel (0) target = $region17
    $region16: #{forward.1} parent=1 // pred_region
      _
    $region17: #{forward.1} parent=1 // pred_fallthru
      _
    %v19 = vld [vmem:[%s0] sm:$0xff]
    %v20 = vlaneseq
    %v21 = vand.u32 %v20, 127
    %v22 = vlaneseq
    %v23 = vshrl.u32 %v22, 7
    %v24 = vsub.s32 0, %v23
    %v25 = vrot.slane %v19, %v24
    %27 = vbcast.lane.b32.xlu0 %v25, 256
    %v28 = vpop.permute.xlu0 %27
    %s30 = sor.u32 256, 8
    %31 = vbcast.lane.b32.xlu0 %v25, %s30
    %v32 = vpop.permute.xlu0 %31
    %v33 = vlaneseq
    %v34 = vshrl.u32 %v33, 7
    %v35 = vsub.s32 1, %v34
    %v36 = vrot.slane %v19, %v35
    %38 = vbcast.lane.b32.xlu0 %v36, 256
    %v39 = vpop.permute.xlu0 %38
    %s41 = sor.u32 256, 8
    %42 = vbcast.lane.b32.xlu0 %v36, %s41
    %v43 = vpop.permute.xlu0 %42
    %v44 = vlaneseq
    %v45 = vshrl.u32 %v44, 7
    %v46 = vsub.s32 2, %v45
    %v47 = vrot.slane %v19, %v46
    %49 = vbcast.lane.b32.xlu0 %v47, 256
    %v50 = vpop.permute.xlu0 %49
    %s52 = sor.u32 256, 8
    %53 = vbcast.lane.b32.xlu0 %v47, %s52
    %v54 = vpop.permute.xlu0 %53
    %v55 = vlaneseq
    %v56 = vshrl.u32 %v55, 7
    %v57 = vsub.s32 3, %v56
    %v58 = vrot.slane %v19, %v57
    %60 = vbcast.lane.b32.xlu0 %v58, 256
    %v61 = vpop.permute.xlu0 %60
    %s63 = sor.u32 256, 8
    %64 = vbcast.lane.b32.xlu0 %v58, %s63
    %v65 = vpop.permute.xlu0 %64
    %v66 = vlaneseq
    %v67 = vshrl.u32 %v66, 7
    %v68 = vsub.s32 4, %v67
    %v69 = vrot.slane %v19, %v68
    %71 = vbcast.lane.b32.xlu0 %v69, 256
    %v72 = vpop.permute.xlu0 %71
    %s74 = sor.u32 256, 8
    %75 = vbcast.lane.b32.xlu0 %v69, %s74
    %v76 = vpop.permute.xlu0 %75
    %v77 = vlaneseq
    %v78 = vshrl.u32 %v77, 7
    %v79 = vsub.s32 5, %v78
    %v80 = vrot.slane %v19, %v79
    %82 = vbcast.lane.b32.xlu0 %v80, 256
    %v83 = vpop.permute.xlu0 %82
    %s85 = sor.u32 256, 8
    %86 = vbcast.lane.b32.xlu0 %v80, %s85
    %v87 = vpop.permute.xlu0 %86
    %v88 = vlaneseq
    %v89 = vshrl.u32 %v88, 7
    %v90 = vsub.s32 6, %v89
    %v91 = vrot.slane %v19, %v90
    %93 = vbcast.lane.b32.xlu0 %v91, 256
    %v94 = vpop.permute.xlu0 %93
    %s96 = sor.u32 256, 8
    %97 = vbcast.lane.b32.xlu0 %v91, %s96
    %v98 = vpop.permute.xlu0 %97
    %v99 = vlaneseq
    %v100 = vshrl.u32 %v99, 7
    %v101 = vsub.s32 7, %v100
    %v102 = vrot.slane %v19, %v101
    %104 = vbcast.lane.b32.xlu0 %v102, 256
    %v105 = vpop.permute.xlu0 %104
    %s107 = sor.u32 256, 8
    %108 = vbcast.lane.b32.xlu0 %v102, %s107
    %v109 = vpop.permute.xlu0 %108
    %vm110 = vcmp.eq.s32.totalorder %v28, %v21
    %vm111 = vcmp.eq.s32.totalorder %v32, %v21
    %vm112 = vcmp.eq.s32.totalorder %v39, %v21
    %vm113 = vcmp.eq.s32.totalorder %v43, %v21
    %vm114 = vcmp.eq.s32.totalorder %v50, %v21
    %vm115 = vcmp.eq.s32.totalorder %v54, %v21
    %vm116 = vcmp.eq.s32.totalorder %v61, %v21
    %vm117 = vcmp.eq.s32.totalorder %v65, %v21
    %vm118 = vcmp.eq.s32.totalorder %v72, %v21
    %vm119 = vcmp.eq.s32.totalorder %v76, %v21
    %vm120 = vcmp.eq.s32.totalorder %v83, %v21
    %vm121 = vcmp.eq.s32.totalorder %v87, %v21
    %vm122 = vcmp.eq.s32.totalorder %v94, %v21
    %vm123 = vcmp.eq.s32.totalorder %v98, %v21
    %vm124 = vcmp.eq.s32.totalorder %v105, %v21
    %vm125 = vcmp.eq.s32.totalorder %v109, %v21
    %v126 = vsel %vm110, 1, 0
    %v127 = vsel %vm111, 1, 0
    %v128 = vsel %vm112, 1, 0
    %v129 = vsel %vm113, 1, 0
    %v130 = vsel %vm114, 1, 0
    %v131 = vsel %vm115, 1, 0
    %v132 = vsel %vm116, 1, 0
    %v133 = vsel %vm117, 1, 0
    %v134 = vsel %vm118, 1, 0
    %v135 = vsel %vm119, 1, 0
    %v136 = vsel %vm120, 1, 0
    %v137 = vsel %vm121, 1, 0
    %v138 = vsel %vm122, 1, 0
    %v139 = vsel %vm123, 1, 0
    %v140 = vsel %vm124, 1, 0
    %v141 = vsel %vm125, 1, 0
    %v142 = vcvt.s32.f32 %v126
    %v143 = vcvt.s32.f32 %v127
    %v144 = vcvt.s32.f32 %v128
    %v145 = vcvt.s32.f32 %v129
    %v146 = vcvt.s32.f32 %v130
    %v147 = vcvt.s32.f32 %v131
    %v148 = vcvt.s32.f32 %v132
    %v149 = vcvt.s32.f32 %v133
    %v150 = vcvt.s32.f32 %v134
    %v151 = vcvt.s32.f32 %v135
    %v152 = vcvt.s32.f32 %v136
    %v153 = vcvt.s32.f32 %v137
    %v154 = vcvt.s32.f32 %v138
    %v155 = vcvt.s32.f32 %v139
    %v156 = vcvt.s32.f32 %v140
    %v157 = vcvt.s32.f32 %v141
    %v158 = vadd.f32 %v142, %v143
    %v159 = vrot.slane %v158, 4
    %v160 = vadd.f32 %v158, %v159
    %v161 = vrot.slane %v160, 2
    %v162 = vadd.f32 %v160, %v161
    %v163 = vrot.slane %v162, 1
    %v164 = vadd.f32 %v162, %v163
    %v165 = vadd.f32 %v144, %v145
    %v166 = vrot.slane %v165, 4
    %v167 = vadd.f32 %v165, %v166
    %v168 = vrot.slane %v167, 2
    %v169 = vadd.f32 %v167, %v168
    %v170 = vrot.slane %v169, 1
    %v171 = vadd.f32 %v169, %v170
    %v172 = vadd.f32 %v146, %v147
    %v173 = vrot.slane %v172, 4
    %v174 = vadd.f32 %v172, %v173
    %v175 = vrot.slane %v174, 2
    %v176 = vadd.f32 %v174, %v175
    %v177 = vrot.slane %v176, 1
    %v178 = vadd.f32 %v176, %v177
    %v179 = vadd.f32 %v148, %v149
    %v180 = vrot.slane %v179, 4
    %v181 = vadd.f32 %v179, %v180
    %v182 = vrot.slane %v181, 2
    %v183 = vadd.f32 %v181, %v182
    %v184 = vrot.slane %v183, 1
    %v185 = vadd.f32 %v183, %v184
    %v186 = vadd.f32 %v150, %v151
    %v187 = vrot.slane %v186, 4
    %v188 = vadd.f32 %v186, %v187
    %v189 = vrot.slane %v188, 2
    %v190 = vadd.f32 %v188, %v189
    %v191 = vrot.slane %v190, 1
    %v192 = vadd.f32 %v190, %v191
    %v193 = vadd.f32 %v152, %v153
    %v194 = vrot.slane %v193, 4
    %v195 = vadd.f32 %v193, %v194
    %v196 = vrot.slane %v195, 2
    %v197 = vadd.f32 %v195, %v196
    %v198 = vrot.slane %v197, 1
    %v199 = vadd.f32 %v197, %v198
    %v200 = vadd.f32 %v154, %v155
    %v201 = vrot.slane %v200, 4
    %v202 = vadd.f32 %v200, %v201
    %v203 = vrot.slane %v202, 2
    %v204 = vadd.f32 %v202, %v203
    %v205 = vrot.slane %v204, 1
    %v206 = vadd.f32 %v204, %v205
    %v207 = vadd.f32 %v156, %v157
    %v208 = vrot.slane %v207, 4
    %v209 = vadd.f32 %v207, %v208
    %v210 = vrot.slane %v209, 2
    %v211 = vadd.f32 %v209, %v210
    %v212 = vrot.slane %v211, 1
    %v213 = vadd.f32 %v211, %v212
    %v214 = vpack.c.bf16 %v164, %v164
    %v215 = vpack.c.bf16 %v171, %v171
    %v216 = vpack.c.bf16 %v178, %v178
    %v217 = vpack.c.bf16 %v185, %v185
    %v218 = vpack.c.bf16 %v192, %v192
    %v219 = vpack.c.bf16 %v199, %v199
    %v220 = vpack.c.bf16 %v206, %v206
    %v221 = vpack.c.bf16 %v213, %v213
    %v222 = vld [vmem:[%s1] sm:$0xf]
    %v223 = vld [vmem:[%s1 + $0x4] sm:$0xf]
    %v224 = vld [vmem:[%s1 + $0x8] sm:$0xf]
    %v225 = vld [vmem:[%s1 + $0xc] sm:$0xf]
    %v226 = vld [vmem:[%s1 + $0x10] sm:$0xf]
    %v227 = vld [vmem:[%s1 + $0x14] sm:$0xf]
    %v228 = vld [vmem:[%s1 + $0x18] sm:$0xf]
    %v229 = vld [vmem:[%s1 + $0x1c] sm:$0xf]
    %v230 = vld [vmem:[%s1 + $0x20] sm:$0xf]
    %v231 = vld [vmem:[%s1 + $0x24] sm:$0xf]
    %v232 = vld [vmem:[%s1 + $0x28] sm:$0xf]
    %v233 = vld [vmem:[%s1 + $0x2c] sm:$0xf]
    %v234 = vld [vmem:[%s1 + $0x30] sm:$0xf]
    %v235 = vld [vmem:[%s1 + $0x34] sm:$0xf]
    %v236 = vld [vmem:[%s1 + $0x38] sm:$0xf]
    %v237 = vld [vmem:[%s1 + $0x3c] sm:$0xf]
    %v246 = vunpack.c.l.b16 %v214
    %v247 = vunpack.c.l.b16 %v215
    %v248 = vunpack.c.l.b16 %v216
    %v249 = vunpack.c.l.b16 %v217
    %v250 = vunpack.c.l.b16 %v218
    %v251 = vunpack.c.l.b16 %v219
    %v252 = vunpack.c.l.b16 %v220
    %v253 = vunpack.c.l.b16 %v221
    %vm254 = vcmask 1041409
    %v255 = vsel %vm254, %v247, %v246
    %vm256 = vcmask 1042434
    %v257 = vsel %vm256, %v248, %v255
    %vm258 = vcmask 1043459
    %v259 = vsel %vm258, %v249, %v257
    %vm260 = vcmask 1044484
    %v261 = vsel %vm260, %v250, %v259
    %vm262 = vcmask 1045509
    %v263 = vsel %vm262, %v251, %v261
    %vm264 = vcmask 1046534
    %v265 = vsel %vm264, %v252, %v263
    %vm266 = vcmask 1047559
    %v267 = vsel %vm266, %v253, %v265
    %v268 = vpack.c.b16 %v267, %v267
    %v286 = vunpack.c.l.b16 %v222
    %v287 = vunpack.c.l.b16 %v223
    %v288 = vunpack.c.l.b16 %v224
    %v289 = vunpack.c.l.b16 %v225
    %v290 = vunpack.c.l.b16 %v226
    %v291 = vunpack.c.l.b16 %v227
    %v292 = vunpack.c.l.b16 %v228
    %v293 = vunpack.c.l.b16 %v229
    %v294 = vunpack.c.l.b16 %v230
    %v295 = vunpack.c.l.b16 %v231
    %v296 = vunpack.c.l.b16 %v232
    %v297 = vunpack.c.l.b16 %v233
    %v298 = vunpack.c.l.b16 %v234
    %v299 = vunpack.c.l.b16 %v235
    %v300 = vunpack.c.l.b16 %v236
    %v301 = vunpack.c.l.b16 %v237
    %v302 = vpack.c.b16 %v287, %v286
    %v303 = vpack.c.b16 %v289, %v288
    %v304 = vpack.c.b16 %v291, %v290
    %v305 = vpack.c.b16 %v293, %v292
    %v306 = vpack.c.b16 %v295, %v294
    %v307 = vpack.c.b16 %v297, %v296
    %v308 = vpack.c.b16 %v299, %v298
    %v309 = vpack.c.b16 %v301, %v300
    %318 = vmatprep.subr.bf16.mxu0 0
    %319 = vmatpush1.bf16.msra.mxu0 %v302
    %320 = vmatprep.subr.bf16.mxu0 0
    %321 = vmatpush1.bf16.msra.mxu0 %v303
    %322 = vmatprep.subr.bf16.mxu0 0
    %323 = vmatpush1.bf16.msra.mxu0 %v304
    %324 = vmatprep.subr.bf16.mxu0 0
    %325 = vmatpush1.bf16.msra.mxu0 %v305
    %326 = vmatprep.subr.bf16.mxu0 0
    %327 = vmatpush1.bf16.msra.mxu0 %v306
    %328 = vmatprep.subr.bf16.mxu0 0
    %329 = vmatpush1.bf16.msra.mxu0 %v307
    %330 = vmatprep.subr.bf16.mxu0 0
    %331 = vmatpush1.bf16.msra.mxu0 %v308
    %332 = vmatprep.subr.bf16.mxu0 0
    %333 = vmatpush1.bf16.msra.mxu0 %v309
    %334 = vmatprep.subr.bf16.mxu0 0
    %335 = vmatpush1.bf16.msra.mxu0 0
    %336 = vmatprep.subr.bf16.mxu0 0
    %337 = vmatpush1.bf16.msra.mxu0 0
    %338 = vmatprep.subr.bf16.mxu0 0
    %339 = vmatpush1.bf16.msra.mxu0 0
    %340 = vmatprep.subr.bf16.mxu0 0
    %341 = vmatpush1.bf16.msra.mxu0 0
    %342 = vmatprep.subr.bf16.mxu0 0
    %343 = vmatpush1.bf16.msra.mxu0 0
    %344 = vmatprep.subr.bf16.mxu0 0
    %345 = vmatpush1.bf16.msra.mxu0 0
    %346 = vmatprep.subr.bf16.mxu0 0
    %347 = vmatpush1.bf16.msra.mxu0 0
    %348 = vmatprep.subr.bf16.mxu0 0
    %349 = vmatpush1.bf16.msra.mxu0 0
    %350 = vmatprep.mubr.bf16.mxu0 0
    %351 = vmatmul.mubr.bf16.gmra.mrb[0].mxu0 %v268
    %v352 = vpop.f32.mrb[0].mxu0
    %v353 = vadd.f32 0.0, %v352
    %v354 = vpop.f32.mrb[0].mxu0
    %v355 = vpop.f32.mrb[0].mxu0
    %v356 = vpop.f32.mrb[0].mxu0
    %357 = vdwg.mxu0
    %v358 = vmul.f32 %v353, 0.0625
    %v359 = vpack.c.bf16 %v358, %v358
    %v360 = vld [vmem:[%s2] sm:$0xf]
    %v361 = vld [vmem:[%s2 + $0x4] sm:$0xf]
    %v362 = vld [vmem:[%s2 + $0x8] sm:$0xf]
    %v363 = vld [vmem:[%s2 + $0xc] sm:$0xf]
    %v364 = vld [vmem:[%s2 + $0x10] sm:$0xf]
    %v365 = vld [vmem:[%s2 + $0x14] sm:$0xf]
    %v366 = vld [vmem:[%s2 + $0x18] sm:$0xf]
    %v367 = vld [vmem:[%s2 + $0x1c] sm:$0xf]
    %v368 = vld [vmem:[%s2 + $0x20] sm:$0xf]
    %v369 = vld [vmem:[%s2 + $0x24] sm:$0xf]
    %v370 = vld [vmem:[%s2 + $0x28] sm:$0xf]
    %v371 = vld [vmem:[%s2 + $0x2c] sm:$0xf]
    %v372 = vld [vmem:[%s2 + $0x30] sm:$0xf]
    %v373 = vld [vmem:[%s2 + $0x34] sm:$0xf]
    %v374 = vld [vmem:[%s2 + $0x38] sm:$0xf]
    %v375 = vld [vmem:[%s2 + $0x3c] sm:$0xf]
    %v376 = vld [vmem:[%s3] sm:$0x1]
    %v378 = vlaneseq
    %v379 = vshrl.u32 %v378, 7
    %v380 = vsub.s32 0, %v379
    %v381 = vrot.slane %v376, %v380
    %v399 = vunpack.c.l.b16 %v360
    %v400 = vunpack.c.l.b16 %v361
    %v401 = vunpack.c.l.b16 %v362
    %v402 = vunpack.c.l.b16 %v363
    %v403 = vunpack.c.l.b16 %v364
    %v404 = vunpack.c.l.b16 %v365
    %v405 = vunpack.c.l.b16 %v366
    %v406 = vunpack.c.l.b16 %v367
    %v407 = vunpack.c.l.b16 %v368
    %v408 = vunpack.c.l.b16 %v369
    %v409 = vunpack.c.l.b16 %v370
    %v410 = vunpack.c.l.b16 %v371
    %v411 = vunpack.c.l.b16 %v372
    %v412 = vunpack.c.l.b16 %v373
    %v413 = vunpack.c.l.b16 %v374
    %v414 = vunpack.c.l.b16 %v375
    %v415 = vpack.c.b16 %v400, %v399
    %v416 = vpack.c.b16 %v402, %v401
    %v417 = vpack.c.b16 %v404, %v403
    %v418 = vpack.c.b16 %v406, %v405
    %v419 = vpack.c.b16 %v408, %v407
    %v420 = vpack.c.b16 %v410, %v409
    %v421 = vpack.c.b16 %v412, %v411
    %v422 = vpack.c.b16 %v414, %v413
    %431 = vmatprep.subr.bf16.mxu0 0
    %432 = vmatpush1.bf16.msra.mxu0 %v415
    %433 = vmatprep.subr.bf16.mxu0 0
    %434 = vmatpush1.bf16.msra.mxu0 %v416
    %435 = vmatprep.subr.bf16.mxu0 0
    %436 = vmatpush1.bf16.msra.mxu0 %v417
    %437 = vmatprep.subr.bf16.mxu0 0
    %438 = vmatpush1.bf16.msra.mxu0 %v418
    %439 = vmatprep.subr.bf16.mxu0 0
    %440 = vmatpush1.bf16.msra.mxu0 %v419
    %441 = vmatprep.subr.bf16.mxu0 0
    %442 = vmatpush1.bf16.msra.mxu0 %v420
    %443 = vmatprep.subr.bf16.mxu0 0
    %444 = vmatpush1.bf16.msra.mxu0 %v421
    %445 = vmatprep.subr.bf16.mxu0 0
    %446 = vmatpush1.bf16.msra.mxu0 %v422
    %447 = vmatprep.subr.bf16.mxu0 0
    %448 = vmatpush1.bf16.msra.mxu0 0
    %449 = vmatprep.subr.bf16.mxu0 0
    %450 = vmatpush1.bf16.msra.mxu0 0
    %451 = vmatprep.subr.bf16.mxu0 0
    %452 = vmatpush1.bf16.msra.mxu0 0
    %453 = vmatprep.subr.bf16.mxu0 0
    %454 = vmatpush1.bf16.msra.mxu0 0
    %455 = vmatprep.subr.bf16.mxu0 0
    %456 = vmatpush1.bf16.msra.mxu0 0
    %457 = vmatprep.subr.bf16.mxu0 0
    %458 = vmatpush1.bf16.msra.mxu0 0
    %459 = vmatprep.subr.bf16.mxu0 0
    %460 = vmatpush1.bf16.msra.mxu0 0
    %461 = vmatprep.subr.bf16.mxu0 0
    %462 = vmatpush1.bf16.msra.mxu0 0
    %463 = vmatprep.mubr.bf16.mxu0 0
    %464 = vmatmul.mubr.bf16.gmra.mrb[0].mxu0 %v359
    %v465 = vpop.f32.mrb[0].mxu0
    %v466 = vadd.f32 %v381, %v465
    %v467 = vpop.f32.mrb[0].mxu0
    %v468 = vpop.f32.mrb[0].mxu0
    %v469 = vpop.f32.mrb[0].mxu0
    %470 = vdwg.mxu0
    %v471 = vxor.u32 %v466, 2147483648
    %v472 = vmul.f32 %v471, 1.442695
    %v473 = vpow.pop %v472
    %v474 = vadd.f32 %v473, 1.0
    %v475 = vrcp.pop %v474
    %v476 = vmul.f32 1.0, %v475
    %477 = vst [vmem:[#allocation2] sm:$0xff] %v476
    // Predicated region
    $region18: #{forward.1} parent=1 // pred_check
      _
    $region19: #{forward.1} parent=1 // pred_check_branch
      %479 = sbr.rel (0) target = $region21
    $region20: #{forward.1} parent=1 // pred_region
      %s481 = ssub.s32 128, 128
      %482 = vsyncadd [#allocation3], %s481
      %s484 = sshll.u32 [#allocation2], 4
      %s485 = int_to_ptr.vmem [resolvable:$true] %s484
      %487 = dma.vmem_to_hbm [thread:$0]  %s485, 128, %s4, [#allocation3]
    $region21: #{forward.1} parent=1 // pred_fallthru
      _
    // Predicated region
    $region22: #{forward.1} parent=1 // pred_check
      _
    $region23: #{forward.1} parent=1 // pred_check_branch
      %489 = sbr.rel (0) target = $region25
    $region24: #{forward.1} parent=1 // pred_region
      %490 = dma.done [#allocation3], 128
    $region25: #{forward.1} parent=1 // pred_fallthru
      _
    %491 = vsyncpa [#allocation3], 1

</llo_original>
